<compile_context>
chip_gen: v5e
topology: v5e:2x2
jax: 0.10.0
libtpu: 0.0.40
codegen_flags: <defaults>
</compile_context>

<pallas_src>
import jax
import jax.numpy as jnp
import numpy as np
from jax import lax
from jax.experimental import pallas as pl
from jax.experimental.pallas import tpu as pltpu

_CHUNK = 8  # sublane-aligned time chunk (one f32 vreg of rows per chunk)


def rnn_kernel(params_ref, x_ref, out_ref):
    """Elman RNN recurrence:  h_t = tanh(w_ih*x_t + w_hh*h_{t-1} + b).

    params_ref : SMEM f32[3]  = [w_ih, w_hh, b_ih + b_hh]
    x_ref      : VMEM f32[seq_p, b_tile]   (one batch tile, seq_p % 8 == 0)
    out_ref    : VMEM f32[seq_p, b_tile]   (all hidden states for this tile)
    """
    w_ih = params_ref[0]
    w_hh = params_ref[1]
    b = params_ref[2]

    seq_p = x_ref.shape[0]
    b_tile = x_ref.shape[1]
    n_chunks = seq_p // _CHUNK

    def chunk_body(c, h):
        base = pl.multiple_of(c * _CHUNK, _CHUNK)
        # Hoisted input contribution: one vectorized VPU pass over the chunk.
        pre = w_ih * x_ref[pl.ds(base, _CHUNK), :] + b            # (8, b_tile)
        # Statically unrolled recurrence over the 8 rows of the chunk.
        rows = []
        for i in range(_CHUNK):
            h = jnp.tanh(pre[i:i + 1, :] + w_hh * h)              # (1, b_tile)
            rows.append(h)
        # Single aligned (8, b_tile) store per chunk (no masked partial stores).
        out_ref[pl.ds(base, _CHUNK), :] = jnp.concatenate(rows, axis=0)
        return h

    h0 = jnp.zeros((1, b_tile), jnp.float32)  # PyTorch default: h_0 = 0
    lax.fori_loop(0, n_chunks, chunk_body, h0)


def _choose_b_tile(seq_p: int) -> int:
    """Largest lane-dense batch tile whose double-buffered in+out blocks stay
    comfortably inside scoped VMEM on every TPU generation (v5e/v6e/v7x)."""
    budget_bytes = 12 * 1024 * 1024              # conservative across chips
    # in block + out block, each double-buffered, f32:
    max_tile = budget_bytes // (4 * seq_p * 4)
    max_tile = max(128, (max_tile // 128) * 128)
    return int(min(max_tile, 1024))


def rede_forward(x, w_ih, w_hh, b_ih, b_hh):
    """Forward pass matching `Rede.forward` (returns (output, h_n)).

    x : (seq_len, batch, 1) float32, time-major like PyTorch nn.RNN default.
    """
    seq, batch, in_sz = x.shape
    assert in_sz == 1

    # Combine the two biases (exact) and pack scalars for SMEM.
    params = jnp.stack(
        [
            jnp.reshape(w_ih, ()).astype(jnp.float32),
            jnp.reshape(w_hh, ()).astype(jnp.float32),
            (jnp.reshape(b_ih, ()) + jnp.reshape(b_hh, ())).astype(jnp.float32),
        ]
    )

    x2d = x[..., 0].astype(jnp.float32)                      # (seq, batch)

    # Pad seq to a multiple of 8 sublanes and batch to a multiple of the
    # lane-dense tile.  Trailing time-padding only produces extra (discarded)
    # rows after the real sequence, so the real outputs are unaffected.
    seq_p = ((seq + _CHUNK - 1) // _CHUNK) * _CHUNK
    b_tile = _choose_b_tile(seq_p)
    batch_p = ((batch + b_tile - 1) // b_tile) * b_tile
    x2d_p = jnp.pad(x2d, ((0, seq_p - seq), (0, batch_p - batch)))

    n_btiles = batch_p // b_tile

    out2d_p = pl.pallas_call(
        rnn_kernel,
        out_shape=jax.ShapeDtypeStruct((seq_p, batch_p), jnp.float32),
        grid=(n_btiles,),
        in_specs=[
            # scalar parameters, untiled, in SMEM
            pl.BlockSpec(memory_space=pltpu.MemorySpace.SMEM),
            # one (seq_p, b_tile) batch slice per grid step
            pl.BlockSpec((seq_p, b_tile), lambda b: (0, b)),
        ],
        out_specs=pl.BlockSpec((seq_p, b_tile), lambda b: (0, b)),
        compiler_params=pltpu.CompilerParams(
            dimension_semantics=("parallel",),
        ),
    )(params, x2d_p)

    out2d = out2d_p[:seq, :batch]                            # strip padding
    output = out2d[..., None]                                # (seq, batch, 1)
    h_n = output[seq - 1:seq]                                # (1, batch, 1)
    return output, h_n


def rede_forward_ref(x, w_ih, w_hh, b_ih, b_hh):
    """Pure-JAX reference (scan) for correctness checking."""
    seq, batch, _ = x.shape
    x2d = x[..., 0].astype(jnp.float32)
    w_ih = jnp.reshape(w_ih, ())
    w_hh = jnp.reshape(w_hh, ())
    b_ih = jnp.reshape(b_ih, ())
    b_hh = jnp.reshape(b_hh, ())

    def step(h, x_t):
        h_new = jnp.tanh(w_ih * x_t + b_ih + w_hh * h + b_hh)
        return h_new, h_new

    h0 = jnp.zeros((batch,), jnp.float32)
    h_final, outs = lax.scan(step, h0, x2d)
    return outs[..., None], h_final[None, :, None]


if __name__ == "__main__":
    key = jax.random.PRNGKey(0)
    k_x, k_wih, k_whh, k_bih, k_bhh = jax.random.split(key, 5)

    seq_len, batch = 8, 2

    # Input shaped like the PyTorch nn.RNN default: (seq_len, batch, input_size=1)
    x = jax.random.normal(k_x, (seq_len, batch, 1), dtype=jnp.float32)

    # Deterministic parameter init matching nn.RNN(1, 1, 1) shapes:
    # weight_ih_l0 (1,1), weight_hh_l0 (1,1), bias_ih_l0 (1,), bias_hh_l0 (1,)
    # PyTorch inits uniform(-1/sqrt(hidden), 1/sqrt(hidden)) = uniform(-1, 1) here.
    w_ih = jax.random.uniform(k_wih, (1, 1), jnp.float32, -1.0, 1.0)
    w_hh = jax.random.uniform(k_whh, (1, 1), jnp.float32, -1.0, 1.0)
    b_ih = jax.random.uniform(k_bih, (1,), jnp.float32, -1.0, 1.0)
    b_hh = jax.random.uniform(k_bhh, (1,), jnp.float32, -1.0, 1.0)

    output, h_n = rede_forward(x, w_ih, w_hh, b_ih, b_hh)
    jax.block_until_ready((output, h_n))

    out_ref, hn_ref = rede_forward_ref(x, w_ih, w_hh, b_ih, b_hh)
    np.testing.assert_allclose(np.asarray(output), np.asarray(out_ref),
                               rtol=1e-5, atol=1e-5)
    np.testing.assert_allclose(np.asarray(h_n), np.asarray(hn_ref),
                               rtol=1e-5, atol=1e-5)

    assert output.shape == (seq_len, batch, 1)
    assert h_n.shape == (1, batch, 1)

    print("KERNEL_OK")
</pallas_src>

<mosaic_0001>
module attributes {stable_mosaic.version = 11 : i64} {
  func.func @rnn_kernel(%arg0: i32, %arg1: memref<3xf32, #tpu.memory_space<smem>>, %arg2: memref<8x1024xf32, #tpu.memory_space<vmem>>, %arg3: memref<8x1024xf32, #tpu.memory_space<vmem>>) attributes {dimension_semantics = [#tpu.dimension_semantics<parallel>], iteration_bounds = array<i64: 1>, scalar_prefetch = 0 : i64, scratch_operands = 0 : i64, tpu.core_type = #tpu.core_type<tc>, window_params = [{transform_indices = @transform_0, window_bounds = array<i64: 3>}, {transform_indices = @transform_1, window_bounds = array<i64: 8, 1024>}, {transform_indices = @transform_2, window_bounds = array<i64: 8, 1024>}]} {
    %c0 = arith.constant 0 : index
    %0 = memref.load %arg1[%c0] : memref<3xf32, #tpu.memory_space<smem>>
    %c1 = arith.constant 1 : index
    %1 = memref.load %arg1[%c1] : memref<3xf32, #tpu.memory_space<smem>>
    %c2 = arith.constant 2 : index
    %2 = memref.load %arg1[%c2] : memref<3xf32, #tpu.memory_space<smem>>
    %cst = arith.constant 0.000000e+00 : f32
    %3 = vector.broadcast %cst : f32 to vector<1x1024xf32>
    %c0_i32 = arith.constant 0 : i32
    %c8_i32 = arith.constant 8 : i32
    %4 = arith.muli %c0_i32, %c8_i32 : i32
    %5 = tpu.assume_multiple %4, 8 : i32
    %6 = arith.index_cast %5 : i32 to index
    %c0_0 = arith.constant 0 : index
    %7 = vector.load %arg2[%6, %c0_0] : memref<8x1024xf32, #tpu.memory_space<vmem>>, vector<8x1024xf32>
    %8 = vector.broadcast %0 : f32 to vector<8x1024xf32>
    %9 = arith.mulf %8, %7 : vector<8x1024xf32>
    %10 = vector.broadcast %2 : f32 to vector<8x1024xf32>
    %11 = arith.addf %9, %10 : vector<8x1024xf32>
    %12 = vector.extract_strided_slice %11 {offsets = [0, 0], sizes = [1, 1024], strides = [1, 1]} : vector<8x1024xf32> to vector<1x1024xf32>
    %13 = vector.broadcast %1 : f32 to vector<1x1024xf32>
    %14 = arith.mulf %13, %3 : vector<1x1024xf32>
    %15 = arith.addf %12, %14 : vector<1x1024xf32>
    %16 = math.tanh %15 : vector<1x1024xf32>
    %17 = vector.extract_strided_slice %11 {offsets = [1, 0], sizes = [1, 1024], strides = [1, 1]} : vector<8x1024xf32> to vector<1x1024xf32>
    %18 = vector.broadcast %1 : f32 to vector<1x1024xf32>
    %19 = arith.mulf %18, %16 : vector<1x1024xf32>
    %20 = arith.addf %17, %19 : vector<1x1024xf32>
    %21 = math.tanh %20 : vector<1x1024xf32>
    %22 = vector.extract_strided_slice %11 {offsets = [2, 0], sizes = [1, 1024], strides = [1, 1]} : vector<8x1024xf32> to vector<1x1024xf32>
    %23 = vector.broadcast %1 : f32 to vector<1x1024xf32>
    %24 = arith.mulf %23, %21 : vector<1x1024xf32>
    %25 = arith.addf %22, %24 : vector<1x1024xf32>
    %26 = math.tanh %25 : vector<1x1024xf32>
    %27 = vector.extract_strided_slice %11 {offsets = [3, 0], sizes = [1, 1024], strides = [1, 1]} : vector<8x1024xf32> to vector<1x1024xf32>
    %28 = vector.broadcast %1 : f32 to vector<1x1024xf32>
    %29 = arith.mulf %28, %26 : vector<1x1024xf32>
    %30 = arith.addf %27, %29 : vector<1x1024xf32>
    %31 = math.tanh %30 : vector<1x1024xf32>
    %32 = vector.extract_strided_slice %11 {offsets = [4, 0], sizes = [1, 1024], strides = [1, 1]} : vector<8x1024xf32> to vector<1x1024xf32>
    %33 = vector.broadcast %1 : f32 to vector<1x1024xf32>
    %34 = arith.mulf %33, %31 : vector<1x1024xf32>
    %35 = arith.addf %32, %34 : vector<1x1024xf32>
    %36 = math.tanh %35 : vector<1x1024xf32>
    %37 = vector.extract_strided_slice %11 {offsets = [5, 0], sizes = [1, 1024], strides = [1, 1]} : vector<8x1024xf32> to vector<1x1024xf32>
    %38 = vector.broadcast %1 : f32 to vector<1x1024xf32>
    %39 = arith.mulf %38, %36 : vector<1x1024xf32>
    %40 = arith.addf %37, %39 : vector<1x1024xf32>
    %41 = math.tanh %40 : vector<1x1024xf32>
    %42 = vector.extract_strided_slice %11 {offsets = [6, 0], sizes = [1, 1024], strides = [1, 1]} : vector<8x1024xf32> to vector<1x1024xf32>
    %43 = vector.broadcast %1 : f32 to vector<1x1024xf32>
    %44 = arith.mulf %43, %41 : vector<1x1024xf32>
    %45 = arith.addf %42, %44 : vector<1x1024xf32>
    %46 = math.tanh %45 : vector<1x1024xf32>
    %47 = vector.extract_strided_slice %11 {offsets = [7, 0], sizes = [1, 1024], strides = [1, 1]} : vector<8x1024xf32> to vector<1x1024xf32>
    %48 = vector.broadcast %1 : f32 to vector<1x1024xf32>
    %49 = arith.mulf %48, %46 : vector<1x1024xf32>
    %50 = arith.addf %47, %49 : vector<1x1024xf32>
    %51 = math.tanh %50 : vector<1x1024xf32>
    %52 = tpu.concatenate %16, %21, %26, %31, %36, %41, %46, %51 in 0 : vector<1x1024xf32>, vector<1x1024xf32>, vector<1x1024xf32>, vector<1x1024xf32>, vector<1x1024xf32>, vector<1x1024xf32>, vector<1x1024xf32>, vector<1x1024xf32> -> vector<8x1024xf32>
    %53 = arith.index_cast %5 : i32 to index
    %c0_1 = arith.constant 0 : index
    %54 = vector.load %arg3[%53, %c0_1] : memref<8x1024xf32, #tpu.memory_space<vmem>>, vector<8x1024xf32>
    tpu.vector_store %arg3[%53, %c0_1], %52 {strides = array<i32>} : memref<8x1024xf32, #tpu.memory_space<vmem>>, vector<8x1024xf32>,
    %c1_i32 = arith.constant 1 : i32
    return
  }
  func.func @transform_0(%arg0: i32) -> i32 {
    %c0_i32 = arith.constant 0 : i32
    %c0_i32_0 = arith.constant 0 : i32
    return %c0_i32 : i32
  }
  func.func @transform_1(%arg0: i32) -> (i32, i32) {
    %c0_i32 = arith.constant 0 : i32
    %c0_i32_0 = arith.constant 0 : i32
    return %c0_i32, %arg0 : i32, i32
  }
  func.func @transform_2(%arg0: i32) -> (i32, i32) {
    %c0_i32 = arith.constant 0 : i32
    %c0_i32_0 = arith.constant 0 : i32
    return %c0_i32, %arg0 : i32, i32
  }
}

</mosaic_0001>

<llo_original>
// kernel: tpu_custom_call.1
$region0: #{tpu_custom_call.1}
  #allocation0 [shape = 'u32[]', space=smem, size = 0x4, offset = 0x4, fixed_abs, tag = 'smem constant byte address 0x4 - core index']
  #allocation1 [shape = 'u32[72,128]{1,0:T(1,128)}', space=vmem, size = 0x9000, scoped, tag = 'internal scratch']
  %s0 = inlined_call_operand.hbm [shape: f32[3], index: 0, kind: input, shape index: {}]
  %s1 = inlined_call_operand.hbm [shape: f32[8,1024], index: 1, kind: input, shape index: {}]
  %s2 = inlined_call_operand.hbm [shape: f32[8,1024], index: 2, kind: output, shape index: {}]
  %s3 = sld [smem:[#allocation0]]
  $region26: #{tpu_custom_call.1} parent=0
    _
  %s5 = ssub.s32 1, %s3
  %s6 = scalar_select 0, %s5, %s3
  $region1: #{tpu_custom_call.1} parent=0
    #allocation2 [shape = 'u8[512]{0}', space=smem, size = 0x200, scoped, tag = 'input window, operand 0, single buffered']
    #allocation3 [shape = 's32[1]{0}', space=sflag, size = 0x4, scoped, tag = 'scoped memory for tpu_custom_call.1']
    #allocation4 [shape = 's32[1]{0}', space=sflag, size = 0x4, scoped, tag = 'scoped memory for tpu_custom_call.1']
    #allocation5 [shape = 's32[1]{0}', space=sflag, size = 0x4, scoped, tag = 'scoped memory for tpu_custom_call.1']
    #allocation6 [shape = 'u8[32768]{0}', space=vmem, size = 0x8000, scoped, tag = 'input window, operand 1, single buffered']
    #allocation7 [shape = 'u8[32768]{0}', space=vmem, size = 0x8000, scoped, tag = 'output window, operand 0, single buffered']
    %7 = vsyncpa [#allocation5], 0
    %8 = vsyncpa [#allocation3], 0
    %9 = vsyncpa [#allocation4], 0
    // Predicated region
    $region2: #{tpu_custom_call.1} parent=1 // pred_check
      _
    $region3: #{tpu_custom_call.1} parent=1 // pred_check_branch
      %11 = sbr.rel (0) target = $region5
    $region4: #{tpu_custom_call.1} parent=1 // pred_region
      %13 = vsyncadd [#allocation5], 0
      %s15 = sshll.u32 %s0, 4
      %s16 = int_to_ptr.hbm [resolvable:$true] %s15
      %18 = dma.hbm_to_smem %s16, 16, [#allocation2], [#allocation5]
    $region5: #{tpu_custom_call.1} parent=1 // pred_fallthru
      _
    // Predicated region
    $region6: #{tpu_custom_call.1} parent=1 // pred_check
      _
    $region7: #{tpu_custom_call.1} parent=1 // pred_check_branch
      %20 = sbr.rel (0) target = $region9
    $region8: #{tpu_custom_call.1} parent=1 // pred_region
      %22 = vsyncadd [#allocation3], 0
      %s24 = sshll.u32 %s1, 4
      %s25 = int_to_ptr.hbm [resolvable:$true] %s24
      %s26 = sshll.u32 [#allocation6], 4
      %s27 = int_to_ptr.vmem [resolvable:$true] %s26
      %29 = dma.hbm_to_vmem [thread:$0]  %s25, 1024, %s27, [#allocation3]
    $region9: #{tpu_custom_call.1} parent=1 // pred_fallthru
      _
    // Predicated region
    $region10: #{tpu_custom_call.1} parent=1 // pred_check
      _
    $region11: #{tpu_custom_call.1} parent=1 // pred_check_branch
      %31 = sbr.rel (0) target = $region13
    $region12: #{tpu_custom_call.1} parent=1 // pred_region
      %33 = dma.done [#allocation5], 16
    $region13: #{tpu_custom_call.1} parent=1 // pred_fallthru
      _
    // Predicated region
    $region14: #{tpu_custom_call.1} parent=1 // pred_check
      _
    $region15: #{tpu_custom_call.1} parent=1 // pred_check_branch
      %35 = sbr.rel (0) target = $region17
    $region16: #{tpu_custom_call.1} parent=1 // pred_region
      %37 = dma.done [#allocation3], 1024
    $region17: #{tpu_custom_call.1} parent=1 // pred_fallthru
      _
    %38 = sfence
    %s39 = sld [smem:[#allocation2]]
    %s40 = sld [smem:[#allocation2 + $0x1]]
    %s41 = sld [smem:[#allocation2 + $0x2]]
    %s42 = smul.u32 0, 8
    %s43 = smul.addr %s42, 8
    %s44 = scalar_lea.vmem [#allocation6], %s43
    %v45 = vld [vmem:[%s44] sm:$0xff]
    %v46 = vld [vmem:[%s44 + $0x8] sm:$0xff]
    %v47 = vld [vmem:[%s44 + $0x10] sm:$0xff]
    %v48 = vld [vmem:[%s44 + $0x18] sm:$0xff]
    %v49 = vld [vmem:[%s44 + $0x20] sm:$0xff]
    %v50 = vld [vmem:[%s44 + $0x28] sm:$0xff]
    %v51 = vld [vmem:[%s44 + $0x30] sm:$0xff]
    %v52 = vld [vmem:[%s44 + $0x38] sm:$0xff]
    %v53 = vstv %s39
    %v54 = vmul.f32 %v53, %v45
    %v55 = vmul.f32 %v53, %v46
    %v56 = vmul.f32 %v53, %v47
    %v57 = vmul.f32 %v53, %v48
    %v58 = vmul.f32 %v53, %v49
    %v59 = vmul.f32 %v53, %v50
    %v60 = vmul.f32 %v53, %v51
    %v61 = vmul.f32 %v53, %v52
    %v62 = vstv %s41
    %v63 = vadd.f32 %v54, %v62
    %v64 = vadd.f32 %v55, %v62
    %v65 = vadd.f32 %v56, %v62
    %v66 = vadd.f32 %v57, %v62
    %v67 = vadd.f32 %v58, %v62
    %v68 = vadd.f32 %v59, %v62
    %v69 = vadd.f32 %v60, %v62
    %v70 = vadd.f32 %v61, %v62
    %v71 = vstv %s40
    %v72 = vmul.f32 %v71, 0.0
    %v73 = vadd.f32 %v63, %v72
    %v74 = vadd.f32 %v64, %v72
    %v75 = vadd.f32 %v65, %v72
    %v76 = vadd.f32 %v66, %v72
    %v77 = vadd.f32 %v67, %v72
    %v78 = vadd.f32 %v68, %v72
    %v79 = vadd.f32 %v69, %v72
    %v80 = vadd.f32 %v70, %v72
    %v81 = vtanh.pop %v73
    %v82 = vtanh.pop %v74
    %v83 = vtanh.pop %v75
    %v84 = vtanh.pop %v76
    %v85 = vtanh.pop %v77
    %v86 = vtanh.pop %v78
    %v87 = vtanh.pop %v79
    %v88 = vtanh.pop %v80
    %v89 = vmul.f32 %v71, %v81
    %v90 = vmul.f32 %v71, %v82
    %v91 = vmul.f32 %v71, %v83
    %v92 = vmul.f32 %v71, %v84
    %v93 = vmul.f32 %v71, %v85
    %v94 = vmul.f32 %v71, %v86
    %v95 = vmul.f32 %v71, %v87
    %v96 = vmul.f32 %v71, %v88
    %v105 = vrot.slane %v89, 7
    %v106 = vrot.slane %v90, 7
    %v107 = vrot.slane %v91, 7
    %v108 = vrot.slane %v92, 7
    %v109 = vrot.slane %v93, 7
    %v110 = vrot.slane %v94, 7
    %v111 = vrot.slane %v95, 7
    %v112 = vrot.slane %v96, 7
    %v121 = vadd.f32 %v63, %v105
    %v122 = vadd.f32 %v64, %v106
    %v123 = vadd.f32 %v65, %v107
    %v124 = vadd.f32 %v66, %v108
    %v125 = vadd.f32 %v67, %v109
    %v126 = vadd.f32 %v68, %v110
    %v127 = vadd.f32 %v69, %v111
    %v128 = vadd.f32 %v70, %v112
    %v129 = vtanh.pop %v121
    %v130 = vtanh.pop %v122
    %v131 = vtanh.pop %v123
    %v132 = vtanh.pop %v124
    %v133 = vtanh.pop %v125
    %v134 = vtanh.pop %v126
    %v135 = vtanh.pop %v127
    %v136 = vtanh.pop %v128
    %v137 = vmul.f32 %v71, %v129
    %v138 = vmul.f32 %v71, %v130
    %v139 = vmul.f32 %v71, %v131
    %v140 = vmul.f32 %v71, %v132
    %v141 = vmul.f32 %v71, %v133
    %v142 = vmul.f32 %v71, %v134
    %v143 = vmul.f32 %v71, %v135
    %v144 = vmul.f32 %v71, %v136
    %v153 = vrot.slane %v137, 7
    %v154 = vrot.slane %v138, 7
    %v155 = vrot.slane %v139, 7
    %v156 = vrot.slane %v140, 7
    %v157 = vrot.slane %v141, 7
    %v158 = vrot.slane %v142, 7
    %v159 = vrot.slane %v143, 7
    %v160 = vrot.slane %v144, 7
    %v169 = vadd.f32 %v63, %v153
    %v170 = vadd.f32 %v64, %v154
    %v171 = vadd.f32 %v65, %v155
    %v172 = vadd.f32 %v66, %v156
    %v173 = vadd.f32 %v67, %v157
    %v174 = vadd.f32 %v68, %v158
    %v175 = vadd.f32 %v69, %v159
    %v176 = vadd.f32 %v70, %v160
    %v177 = vtanh.pop %v169
    %v178 = vtanh.pop %v170
    %v179 = vtanh.pop %v171
    %v180 = vtanh.pop %v172
    %v181 = vtanh.pop %v173
    %v182 = vtanh.pop %v174
    %v183 = vtanh.pop %v175
    %v184 = vtanh.pop %v176
    %v185 = vmul.f32 %v71, %v177
    %v186 = vmul.f32 %v71, %v178
    %v187 = vmul.f32 %v71, %v179
    %v188 = vmul.f32 %v71, %v180
    %v189 = vmul.f32 %v71, %v181
    %v190 = vmul.f32 %v71, %v182
    %v191 = vmul.f32 %v71, %v183
    %v192 = vmul.f32 %v71, %v184
    %v201 = vrot.slane %v185, 7
    %v202 = vrot.slane %v186, 7
    %v203 = vrot.slane %v187, 7
    %v204 = vrot.slane %v188, 7
    %v205 = vrot.slane %v189, 7
    %v206 = vrot.slane %v190, 7
    %v207 = vrot.slane %v191, 7
    %v208 = vrot.slane %v192, 7
    %v217 = vadd.f32 %v63, %v201
    %v218 = vadd.f32 %v64, %v202
    %v219 = vadd.f32 %v65, %v203
    %v220 = vadd.f32 %v66, %v204
    %v221 = vadd.f32 %v67, %v205
    %v222 = vadd.f32 %v68, %v206
    %v223 = vadd.f32 %v69, %v207
    %v224 = vadd.f32 %v70, %v208
    %v225 = vtanh.pop %v217
    %v226 = vtanh.pop %v218
    %v227 = vtanh.pop %v219
    %v228 = vtanh.pop %v220
    %v229 = vtanh.pop %v221
    %v230 = vtanh.pop %v222
    %v231 = vtanh.pop %v223
    %v232 = vtanh.pop %v224
    %v233 = vmul.f32 %v71, %v225
    %v234 = vmul.f32 %v71, %v226
    %v235 = vmul.f32 %v71, %v227
    %v236 = vmul.f32 %v71, %v228
    %v237 = vmul.f32 %v71, %v229
    %v238 = vmul.f32 %v71, %v230
    %v239 = vmul.f32 %v71, %v231
    %v240 = vmul.f32 %v71, %v232
    %v249 = vrot.slane %v233, 7
    %v250 = vrot.slane %v234, 7
    %v251 = vrot.slane %v235, 7
    %v252 = vrot.slane %v236, 7
    %v253 = vrot.slane %v237, 7
    %v254 = vrot.slane %v238, 7
    %v255 = vrot.slane %v239, 7
    %v256 = vrot.slane %v240, 7
    %v265 = vadd.f32 %v63, %v249
    %v266 = vadd.f32 %v64, %v250
    %v267 = vadd.f32 %v65, %v251
    %v268 = vadd.f32 %v66, %v252
    %v269 = vadd.f32 %v67, %v253
    %v270 = vadd.f32 %v68, %v254
    %v271 = vadd.f32 %v69, %v255
    %v272 = vadd.f32 %v70, %v256
    %v273 = vtanh.pop %v265
    %v274 = vtanh.pop %v266
    %v275 = vtanh.pop %v267
    %v276 = vtanh.pop %v268
    %v277 = vtanh.pop %v269
    %v278 = vtanh.pop %v270
    %v279 = vtanh.pop %v271
    %v280 = vtanh.pop %v272
    %v281 = vmul.f32 %v71, %v273
    %v282 = vmul.f32 %v71, %v274
    %v283 = vmul.f32 %v71, %v275
    %v284 = vmul.f32 %v71, %v276
    %v285 = vmul.f32 %v71, %v277
    %v286 = vmul.f32 %v71, %v278
    %v287 = vmul.f32 %v71, %v279
    %v288 = vmul.f32 %v71, %v280
    %v297 = vrot.slane %v281, 7
    %v298 = vrot.slane %v282, 7
    %v299 = vrot.slane %v283, 7
    %v300 = vrot.slane %v284, 7
    %v301 = vrot.slane %v285, 7
    %v302 = vrot.slane %v286, 7
    %v303 = vrot.slane %v287, 7
    %v304 = vrot.slane %v288, 7
    %v313 = vadd.f32 %v63, %v297
    %v314 = vadd.f32 %v64, %v298
    %v315 = vadd.f32 %v65, %v299
    %v316 = vadd.f32 %v66, %v300
    %v317 = vadd.f32 %v67, %v301
    %v318 = vadd.f32 %v68, %v302
    %v319 = vadd.f32 %v69, %v303
    %v320 = vadd.f32 %v70, %v304
    %v321 = vtanh.pop %v313
    %v322 = vtanh.pop %v314
    %v323 = vtanh.pop %v315
    %v324 = vtanh.pop %v316
    %v325 = vtanh.pop %v317
    %v326 = vtanh.pop %v318
    %v327 = vtanh.pop %v319
    %v328 = vtanh.pop %v320
    %v329 = vmul.f32 %v71, %v321
    %v330 = vmul.f32 %v71, %v322
    %v331 = vmul.f32 %v71, %v323
    %v332 = vmul.f32 %v71, %v324
    %v333 = vmul.f32 %v71, %v325
    %v334 = vmul.f32 %v71, %v326
    %v335 = vmul.f32 %v71, %v327
    %v336 = vmul.f32 %v71, %v328
    %v345 = vrot.slane %v329, 7
    %v346 = vrot.slane %v330, 7
    %v347 = vrot.slane %v331, 7
    %v348 = vrot.slane %v332, 7
    %v349 = vrot.slane %v333, 7
    %v350 = vrot.slane %v334, 7
    %v351 = vrot.slane %v335, 7
    %v352 = vrot.slane %v336, 7
    %v361 = vadd.f32 %v63, %v345
    %v362 = vadd.f32 %v64, %v346
    %v363 = vadd.f32 %v65, %v347
    %v364 = vadd.f32 %v66, %v348
    %v365 = vadd.f32 %v67, %v349
    %v366 = vadd.f32 %v68, %v350
    %v367 = vadd.f32 %v69, %v351
    %v368 = vadd.f32 %v70, %v352
    %v369 = vtanh.pop %v361
    %v370 = vtanh.pop %v362
    %v371 = vtanh.pop %v363
    %v372 = vtanh.pop %v364
    %v373 = vtanh.pop %v365
    %v374 = vtanh.pop %v366
    %v375 = vtanh.pop %v367
    %v376 = vtanh.pop %v368
    %v377 = vmul.f32 %v71, %v369
    %v378 = vmul.f32 %v71, %v370
    %v379 = vmul.f32 %v71, %v371
    %v380 = vmul.f32 %v71, %v372
    %v381 = vmul.f32 %v71, %v373
    %v382 = vmul.f32 %v71, %v374
    %v383 = vmul.f32 %v71, %v375
    %v384 = vmul.f32 %v71, %v376
    %v393 = vrot.slane %v377, 7
    %v394 = vrot.slane %v378, 7
    %v395 = vrot.slane %v379, 7
    %v396 = vrot.slane %v380, 7
    %v397 = vrot.slane %v381, 7
    %v398 = vrot.slane %v382, 7
    %v399 = vrot.slane %v383, 7
    %v400 = vrot.slane %v384, 7
    %v409 = vadd.f32 %v63, %v393
    %v410 = vadd.f32 %v64, %v394
    %v411 = vadd.f32 %v65, %v395
    %v412 = vadd.f32 %v66, %v396
    %v413 = vadd.f32 %v67, %v397
    %v414 = vadd.f32 %v68, %v398
    %v415 = vadd.f32 %v69, %v399
    %v416 = vadd.f32 %v70, %v400
    %v417 = vtanh.pop %v409
    %v418 = vtanh.pop %v410
    %v419 = vtanh.pop %v411
    %v420 = vtanh.pop %v412
    %v421 = vtanh.pop %v413
    %v422 = vtanh.pop %v414
    %v423 = vtanh.pop %v415
    %v424 = vtanh.pop %v416
    %vm425 = vcmask 1040384
    %v426 = vsel %vm425, %v81, %v129
    %v427 = vsel %vm425, %v82, %v130
    %v428 = vsel %vm425, %v83, %v131
    %v429 = vsel %vm425, %v84, %v132
    %v430 = vsel %vm425, %v85, %v133
    %v431 = vsel %vm425, %v86, %v134
    %v432 = vsel %vm425, %v87, %v135
    %v433 = vsel %vm425, %v88, %v136
    %vm434 = vcmask 1041408
    %v435 = vsel %vm434, %v426, %v177
    %v436 = vsel %vm434, %v427, %v178
    %v437 = vsel %vm434, %v428, %v179
    %v438 = vsel %vm434, %v429, %v180
    %v439 = vsel %vm434, %v430, %v181
    %v440 = vsel %vm434, %v431, %v182
    %v441 = vsel %vm434, %v432, %v183
    %v442 = vsel %vm434, %v433, %v184
    %vm443 = vcmask 1042432
    %v444 = vsel %vm443, %v435, %v225
    %v445 = vsel %vm443, %v436, %v226
    %v446 = vsel %vm443, %v437, %v227
    %v447 = vsel %vm443, %v438, %v228
    %v448 = vsel %vm443, %v439, %v229
    %v449 = vsel %vm443, %v440, %v230
    %v450 = vsel %vm443, %v441, %v231
    %v451 = vsel %vm443, %v442, %v232
    %vm452 = vcmask 1043456
    %v453 = vsel %vm452, %v444, %v273
    %v454 = vsel %vm452, %v445, %v274
    %v455 = vsel %vm452, %v446, %v275
    %v456 = vsel %vm452, %v447, %v276
    %v457 = vsel %vm452, %v448, %v277
    %v458 = vsel %vm452, %v449, %v278
    %v459 = vsel %vm452, %v450, %v279
    %v460 = vsel %vm452, %v451, %v280
    %vm461 = vcmask 1044480
    %v462 = vsel %vm461, %v453, %v321
    %v463 = vsel %vm461, %v454, %v322
    %v464 = vsel %vm461, %v455, %v323
    %v465 = vsel %vm461, %v456, %v324
    %v466 = vsel %vm461, %v457, %v325
    %v467 = vsel %vm461, %v458, %v326
    %v468 = vsel %vm461, %v459, %v327
    %v469 = vsel %vm461, %v460, %v328
    %vm470 = vcmask 1045504
    %v471 = vsel %vm470, %v462, %v369
    %v472 = vsel %vm470, %v463, %v370
    %v473 = vsel %vm470, %v464, %v371
    %v474 = vsel %vm470, %v465, %v372
    %v475 = vsel %vm470, %v466, %v373
    %v476 = vsel %vm470, %v467, %v374
    %v477 = vsel %vm470, %v468, %v375
    %v478 = vsel %vm470, %v469, %v376
    %vm479 = vcmask 1046528
    %v480 = vsel %vm479, %v471, %v417
    %v481 = vsel %vm479, %v472, %v418
    %v482 = vsel %vm479, %v473, %v419
    %v483 = vsel %vm479, %v474, %v420
    %v484 = vsel %vm479, %v475, %v421
    %v485 = vsel %vm479, %v476, %v422
    %v486 = vsel %vm479, %v477, %v423
    %v487 = vsel %vm479, %v478, %v424
    %s488 = smul.addr %s42, 8
    %s489 = scalar_lea.vmem [#allocation7], %s488
    %490 = vst [vmem:[%s489] sm:$0xff] %v480
    %491 = vst [vmem:[%s489 + $0x8] sm:$0xff] %v481
    %492 = vst [vmem:[%s489 + $0x10] sm:$0xff] %v482
    %493 = vst [vmem:[%s489 + $0x18] sm:$0xff] %v483
    %494 = vst [vmem:[%s489 + $0x20] sm:$0xff] %v484
    %495 = vst [vmem:[%s489 + $0x28] sm:$0xff] %v485
    %496 = vst [vmem:[%s489 + $0x30] sm:$0xff] %v486
    %497 = vst [vmem:[%s489 + $0x38] sm:$0xff] %v487
    // Predicated region
    $region18: #{tpu_custom_call.1} parent=1 // pred_check
      _
    $region19: #{tpu_custom_call.1} parent=1 // pred_check_branch
      %499 = sbr.rel (0) target = $region21
    $region20: #{tpu_custom_call.1} parent=1 // pred_region
      %501 = vsyncadd [#allocation4], 0
      %s503 = sshll.u32 [#allocation7], 4
      %s504 = int_to_ptr.vmem [resolvable:$true] %s503
      %s505 = sshll.u32 %s2, 4
      %s506 = int_to_ptr.hbm [resolvable:$true] %s505
      %508 = dma.vmem_to_hbm [thread:$0]  %s504, 1024, %s506, [#allocation4]
    $region21: #{tpu_custom_call.1} parent=1 // pred_fallthru
      _
    // Predicated region
    $region22: #{tpu_custom_call.1} parent=1 // pred_check
      _
    $region23: #{tpu_custom_call.1} parent=1 // pred_check_branch
      %510 = sbr.rel (0) target = $region25
    $region24: #{tpu_custom_call.1} parent=1 // pred_region
      %512 = dma.done [#allocation4], 1024
    $region25: #{tpu_custom_call.1} parent=1 // pred_fallthru
      _
    %513 = vsyncpa [#allocation3], 1
    %514 = vsyncpa [#allocation4], 1
    %515 = vsyncpa [#allocation5], 1

</llo_original>
